<compile_context>
chip_gen: v6e
topology: v6e:2x2x1
jax: 0.10.0
libtpu: 0.0.40
codegen_flags: <defaults>
</compile_context>

<pallas_src>
import functools

import jax
import jax.numpy as jnp
from jax.experimental import pallas as pl
from jax.experimental.pallas import tpu as pltpu


def _round_up(x, m):
    return ((x + m - 1) // m) * m


def _cdiv(a, b):
    return (a + b - 1) // b


@functools.lru_cache(maxsize=None)
def _tpu_generation_info():
    """Returns (device_kind, vmem_capacity_bytes, lane_multiple, default_block_b)."""
    kind = ""
    try:
        kind = jax.devices()[0].device_kind.lower()
    except Exception:
        pass
    vmem_cap = None
    try:
        vmem_cap = int(pltpu.get_tpu_info().vmem_capacity_bytes)
    except Exception:
        pass
    newer = ("v6" in kind) or ("v7" in kind)
    lane_multiple = 256 if newer else 128      # v6e/v7x: 2x256x256 MXU, v5e: 4x128x128
    default_block_b = 256 if newer else 128    # v5e: smaller M tile, smaller scoped VMEM
    if vmem_cap is None:
        vmem_cap = (64 << 20) if "v7" in kind else (128 << 20)
    return kind, vmem_cap, lane_multiple, default_block_b


# --------------------------------------------------------------------------
# Parameter preparation (hoisted out of the per-call hot path).
# --------------------------------------------------------------------------
def prepare_params(params, *, eps=1e-5, weight_dtype=jnp.bfloat16,
                   lane_multiple=None):
    """Fold BatchNorm (running stats) into the two Linears, transpose to
    (in, out), cast, and pad to a lane-dense square (Dp x Dp). Call once per
    weight update and reuse across forward calls."""
    if lane_multiple is None:
        _, _, lane_multiple, _ = _tpu_generation_info()
    f32 = jnp.float32
    D = params["w1"].shape[0]
    Dp = _round_up(max(D, 128), lane_multiple)

    def fold(w, b, gamma, beta, mean, var):
        scale = gamma.astype(f32) / jnp.sqrt(var.astype(f32) + eps)      # (D,)
        shift = beta.astype(f32) - mean.astype(f32) * scale              # (D,)
        w_f = (w.astype(f32).T * scale[None, :]).astype(weight_dtype)    # (in, out)
        t_f = b.astype(f32) * scale + shift                              # (D,)
        return w_f, t_f

    w1f, t1 = fold(params["w1"], params["b1"], params["bn1_gamma"],
                   params["bn1_beta"], params["bn1_mean"], params["bn1_var"])
    w2f, t2 = fold(params["w2"], params["b2"], params["bn2_gamma"],
                   params["bn2_beta"], params["bn2_mean"], params["bn2_var"])

    pad = Dp - D
    return {
        "w1": jnp.pad(w1f, ((0, pad), (0, pad))),
        "t1": jnp.pad(t1, (0, pad)).reshape(1, Dp).astype(f32),
        "w2": jnp.pad(w2f, ((0, pad), (0, pad))),
        "t2": jnp.pad(t2, (0, pad)).reshape(1, Dp).astype(f32),
        "dim": D,
        "dim_padded": Dp,
    }


# --------------------------------------------------------------------------
# Kernels
# --------------------------------------------------------------------------
def _resident_kernel(x_ref, w1_ref, t1_ref, w2_ref, t2_ref, o_ref):
    """Whole DxD weights resident in VMEM; one (TB, Dp) batch tile per step."""
    xc = x_ref[...].astype(w1_ref.dtype)
    # Linear1 (+folded BN1) + ReLU. Dropout(eval) == identity.
    h = jnp.dot(xc, w1_ref[...], preferred_element_type=jnp.float32)
    h = jnp.maximum(h + t1_ref[...], 0.0)
    # Linear2 (+folded BN2)
    h = jnp.dot(h.astype(w2_ref.dtype), w2_ref[...],
                preferred_element_type=jnp.float32)
    h = h + t2_ref[...]
    # residual add + final ReLU
    res = x_ref[...].astype(jnp.float32)
    o_ref[...] = jnp.maximum(h + res, 0.0).astype(o_ref.dtype)


def _hidden_tiled_kernel(x_ref, w1_ref, t1_ref, w2_ref, t2_ref, o_ref, acc_ref):
    """Large-D path. grid = (batch_tiles, hidden_tiles). Per step streams a
    (Dp, TK) column slice of w1 and a (TK, Dp) row slice of w2; the second
    matmul accumulates into a resident f32 VMEM accumulator."""
    j = pl.program_id(1)

    @pl.when(j == 0)
    def _():
        acc_ref[...] = jnp.zeros_like(acc_ref)

    xc = x_ref[...].astype(w1_ref.dtype)
    h = jnp.dot(xc, w1_ref[...], preferred_element_type=jnp.float32)   # (TB, TK)
    h = jnp.maximum(h + t1_ref[...], 0.0)                              # ReLU is elementwise -> exact per-slice
    acc_ref[...] += jnp.dot(h.astype(w2_ref.dtype), w2_ref[...],
                            preferred_element_type=jnp.float32)        # (TB, Dp)

    @pl.when(j == pl.num_programs(1) - 1)
    def _():
        res = x_ref[...].astype(jnp.float32)
        o_ref[...] = jnp.maximum(acc_ref[...] + t2_ref[...] + res,
                                 0.0).astype(o_ref.dtype)


# --------------------------------------------------------------------------
# Hot-path wrapper
# --------------------------------------------------------------------------
def residual_block_prepared(x, prep, *, block_b=None,
                            activation_dtype=jnp.float32,
                            hidden_block=None, force_hidden_tiling=False):
    """x: (B, D) float32. prep: output of prepare_params (reused across calls)."""
    B, D = x.shape
    assert D == prep["dim"], f"feature dim mismatch: {D} vs {prep['dim']}"
    Dp = prep["dim_padded"]
    w1, t1, w2, t2 = prep["w1"], prep["t1"], prep["w2"], prep["t2"]
    w_itemsize = w1.dtype.itemsize
    x_itemsize = jnp.dtype(activation_dtype).itemsize
    f32 = jnp.float32

    _, vmem_cap, _, default_block_b = _tpu_generation_info()
    # Generation-aware scoped-VMEM cap (v7x has only 64 MiB physical per TC).
    vmem_limit_cap = int(min(100 << 20, vmem_cap - (12 << 20)))
    vmem_limit_cap = max(vmem_limit_cap, 24 << 20)

    # ---- batch-tile selection -------------------------------------------
    if block_b is None:
        block_b = default_block_b
        if Dp <= 1024:
            # Small-D regime is HBM-bound: bigger batch tiles amortize per-step
            # overhead and approach the HBM roofline.
            block_b = max(block_b, 512)
    # Keep per-tile activations (x, out, acc, double-buffered) within ~40% of
    # the VMEM limit (matters for very large D).
    row_bytes = Dp * (2 * x_itemsize + 3 * 4)
    max_tb = max(8, ((int(vmem_limit_cap * 0.4) // row_bytes) // 8) * 8)
    block_b = max(8, min(block_b, max_tb))
    # Balanced tiling: minimizes zero-row padding waste for ragged B.
    n_b = max(1, _cdiv(B, block_b))
    TB = _round_up(_cdiv(B, n_b), 8)
    Bp = n_b * TB

    x_p = jnp.pad(x, ((0, Bp - B), (0, Dp - D))).astype(activation_dtype)

    flops = 4 * Bp * Dp * Dp + 6 * Bp * Dp
    bytes_accessed = (Bp * Dp * (x_itemsize + 4)
                      + 2 * Dp * Dp * w_itemsize + 2 * Dp * 4)
    cost = pl.CostEstimate(flops=flops, transcendentals=0,
                           bytes_accessed=bytes_accessed)
    out_shape = jax.ShapeDtypeStruct((Bp, Dp), f32)

    # ---- path selection ---------------------------------------------------
    resident_weight_bytes = 2 * Dp * Dp * w_itemsize          # single-buffered target
    act_bytes = 2 * TB * Dp * (x_itemsize + 4)                # x + out, double-buffered
    fits_resident = (resident_weight_bytes + act_bytes + (8 << 20)) <= vmem_limit_cap

    if fits_resident and not force_hidden_tiling:
        # -------- resident-weight path (small/medium D) --------
        vmem_budget = int(min(max(2 * resident_weight_bytes + act_bytes + (6 << 20),
                                  32 << 20), vmem_limit_cap))
        grid = (n_b,)
        x_spec = pl.BlockSpec((TB, Dp), lambda i: (i, 0))   # streamed per step
        o_spec = pl.BlockSpec((TB, Dp), lambda i: (i, 0))

        def run(buffer_once):
            # Constant index_map -> weights/biases stay resident; Buffered(1)
            # drops the second pipeline buffer (halves resident weight VMEM).
            kw = {"pipeline_mode": pl.Buffered(1)} if buffer_once else {}
            w_spec = pl.BlockSpec((Dp, Dp), lambda i: (0, 0), **kw)
            t_spec = pl.BlockSpec((1, Dp), lambda i: (0, 0), **kw)
            return pl.pallas_call(
                _resident_kernel,
                out_shape=out_shape,
                grid=grid,
                in_specs=[x_spec, w_spec, t_spec, w_spec, t_spec],
                out_specs=o_spec,
                compiler_params=pltpu.CompilerParams(
                    dimension_semantics=("parallel",),   # shard batch on v7x's 2 TCs
                    vmem_limit_bytes=vmem_budget),
                cost_estimate=cost,
            )(x_p, w1, t1, w2, t2)

        try:
            out = run(True)
        except Exception:
            out = run(False)   # jax without pipeline_mode support: default buffering
    else:
        # -------- hidden-tiled path (large D, e.g. v7x 64 MiB VMEM) --------
        if hidden_block is None:
            TK = 512 if Dp % 512 == 0 else (256 if Dp % 256 == 0 else 128)
            while TK > 128 and 4 * Dp * TK * w_itemsize > vmem_limit_cap // 2:
                TK //= 2
        else:
            TK = hidden_block
        assert Dp % TK == 0 and TK % 128 == 0, "hidden_block must divide Dp (mult of 128)"
        n_h = Dp // TK

        vmem_budget = (4 * Dp * TK * w_itemsize     # w1/w2 slices, double-buffered
                       + 2 * TB * Dp * x_itemsize   # x tile
                       + 2 * TB * Dp * 4            # out tile
                       + TB * Dp * 4                # accumulator scratch
                       + (6 << 20))
        vmem_budget = int(min(max(vmem_budget, 32 << 20), vmem_limit_cap))

        grid = (n_b, n_h)   # reduction (hidden) axis last
        out = pl.pallas_call(
            _hidden_tiled_kernel,
            out_shape=out_shape,
            grid=grid,
            in_specs=[
                pl.BlockSpec((TB, Dp), lambda i, j: (i, 0)),   # x (resident over j)
                pl.BlockSpec((Dp, TK), lambda i, j: (0, j)),   # w1 column slice
                pl.BlockSpec((1, TK), lambda i, j: (0, j)),    # t1 slice
                pl.BlockSpec((TK, Dp), lambda i, j: (j, 0)),   # w2 row slice
                pl.BlockSpec((1, Dp), lambda i, j: (0, 0)),    # t2 (resident)
            ],
            out_specs=pl.BlockSpec((TB, Dp), lambda i, j: (i, 0)),
            scratch_shapes=[pltpu.VMEM((TB, Dp), jnp.float32)],
            compiler_params=pltpu.CompilerParams(
                dimension_semantics=("parallel", "arbitrary"),
                vmem_limit_bytes=vmem_budget),
            cost_estimate=cost,
        )(x_p, w1, t1, w2, t2)

    return out[:B, :D]


def residual_block(x, params, *, eps=1e-5, weight_dtype=jnp.bfloat16, **kwargs):
    """Convenience wrapper: fold/pad params then apply. For inference reuse,
    call prepare_params once and residual_block_prepared per step."""
    prep = prepare_params(params, eps=eps, weight_dtype=weight_dtype)
    return residual_block_prepared(x, prep, **kwargs)


# --------------------------------------------------------------------------
# Reference + demo
# --------------------------------------------------------------------------
def init_params(key, dim):
    ks = jax.random.split(key, 8)
    lim = 1.0 / jnp.sqrt(dim)
    return {
        # Linear layers: torch convention weight (out, in), bias (out,)
        "w1": jax.random.uniform(ks[0], (dim, dim), jnp.float32, -lim, lim),
        "b1": jax.random.uniform(ks[1], (dim,), jnp.float32, -lim, lim),
        "w2": jax.random.uniform(ks[2], (dim, dim), jnp.float32, -lim, lim),
        "b2": jax.random.uniform(ks[3], (dim,), jnp.float32, -lim, lim),
        # BatchNorm1d affine params + running statistics
        "bn1_gamma": 1.0 + 0.1 * jax.random.normal(ks[4], (dim,), jnp.float32),
        "bn1_beta": 0.1 * jax.random.normal(ks[5], (dim,), jnp.float32),
        "bn1_mean": 0.05 * jax.random.normal(ks[6], (dim,), jnp.float32),
        "bn1_var": jnp.abs(1.0 + 0.1 * jax.random.normal(ks[7], (dim,), jnp.float32)),
        "bn2_gamma": jnp.ones((dim,), jnp.float32),
        "bn2_beta": jnp.zeros((dim,), jnp.float32),
        "bn2_mean": jnp.zeros((dim,), jnp.float32),
        "bn2_var": jnp.ones((dim,), jnp.float32),
    }


def reference_forward(x, params, eps=1e-5):
    """Plain-JAX reference mirroring the PyTorch eval-mode forward."""
    h = x @ params["w1"].T + params["b1"]
    h = (params["bn1_gamma"] * (h - params["bn1_mean"])
         / jnp.sqrt(params["bn1_var"] + eps) + params["bn1_beta"])
    h = jnp.maximum(h, 0.0)
    h = h @ params["w2"].T + params["b2"]
    h = (params["bn2_gamma"] * (h - params["bn2_mean"])
         / jnp.sqrt(params["bn2_var"] + eps) + params["bn2_beta"])
    return jnp.maximum(h + x, 0.0)


if __name__ == "__main__":
    key = jax.random.PRNGKey(0)
    k_x, k_p, k_x2, k_p2 = jax.random.split(key, 4)

    # Small demo shapes consistent with the module.
    batch, dim = 8, 32
    x = jax.random.normal(k_x, (batch, dim), jnp.float32)
    params = init_params(k_p, dim)
    ref = reference_forward(x, params)

    # Hot path: fold/pad weights once (bf16 default), reuse across calls.
    prep_bf16 = prepare_params(params)
    out = jax.block_until_ready(residual_block_prepared(x, prep_bf16))
    assert out.shape == (batch, dim)
    assert jnp.allclose(out, ref, atol=5e-2, rtol=5e-2), "bf16 mismatch vs reference"

    # f32 weights path (note: default MXU precision still truncates inputs to
    # bf16, so this mostly just doubles weight VMEM/BW).
    prep_f32 = prepare_params(params, weight_dtype=jnp.float32)
    out_f32 = jax.block_until_ready(residual_block_prepared(x, prep_f32))
    assert out_f32.shape == (batch, dim)
    assert jnp.allclose(out_f32, ref, atol=1e-4, rtol=1e-4), "f32 mismatch vs reference"

    # Exercise the hidden-tiled (large-D / v7x) path on a small problem.
    batch2, dim2 = 12, 160
    x2 = jax.random.normal(k_x2, (batch2, dim2), jnp.float32)
    params2 = init_params(k_p2, dim2)
    ref2 = reference_forward(x2, params2)
    prep2 = prepare_params(params2)
    out2 = jax.block_until_ready(residual_block_prepared(
        x2, prep2, force_hidden_tiling=True, hidden_block=128))
    assert out2.shape == (batch2, dim2)
    assert jnp.allclose(out2, ref2, atol=5e-2, rtol=5e-2), "tiled-path mismatch vs reference"

    print("KERNEL_OK")
</pallas_src>

<mosaic_0001>
module attributes {stable_mosaic.version = 11 : i64} {
  func.func @_resident_kernel(%arg0: i32, %arg1: memref<8x128xf32, #tpu.memory_space<vmem>>, %arg2: memref<128x128xbf16, #tpu.memory_space<vmem>>, %arg3: memref<1x128xf32, #tpu.memory_space<vmem>>, %arg4: memref<128x128xbf16, #tpu.memory_space<vmem>>, %arg5: memref<1x128xf32, #tpu.memory_space<vmem>>, %arg6: memref<8x128xf32, #tpu.memory_space<vmem>>) attributes {dimension_semantics = [#tpu.dimension_semantics<parallel>], iteration_bounds = array<i64: 1>, scalar_prefetch = 0 : i64, scratch_operands = 0 : i64, tpu.core_type = #tpu.core_type<tc>, window_params = [{transform_indices = @transform_0, window_bounds = array<i64: 8, 128>}, {pipeline_mode = #tpu.pipeline_mode<synchronous>, transform_indices = @transform_1, window_bounds = array<i64: 128, 128>}, {pipeline_mode = #tpu.pipeline_mode<synchronous>, transform_indices = @transform_2, window_bounds = array<i64: 1, 128>}, {pipeline_mode = #tpu.pipeline_mode<synchronous>, transform_indices = @transform_3, window_bounds = array<i64: 128, 128>}, {pipeline_mode = #tpu.pipeline_mode<synchronous>, transform_indices = @transform_4, window_bounds = array<i64: 1, 128>}, {transform_indices = @transform_5, window_bounds = array<i64: 8, 128>}]} {
    %c0 = arith.constant 0 : index
    %c0_0 = arith.constant 0 : index
    %0 = vector.load %arg1[%c0, %c0_0] : memref<8x128xf32, #tpu.memory_space<vmem>>, vector<8x128xf32>
    %1 = arith.truncf %0 : vector<8x128xf32> to vector<8x128xbf16>
    %c0_1 = arith.constant 0 : index
    %c0_2 = arith.constant 0 : index
    %2 = vector.load %arg2[%c0_1, %c0_2] : memref<128x128xbf16, #tpu.memory_space<vmem>>, vector<128x128xbf16>
    %cst = arith.constant dense<0.000000e+00> : vector<8x128xf32>
    %3 = tpu.matmul %1, %2, %cst {dimension_numbers = #tpu.dot_dimension_numbers<[1], [0], [0], [1], [0, 0, 1, 1], [], []>} : vector<8x128xbf16>, vector<128x128xbf16>, vector<8x128xf32> -> vector<8x128xf32>
    %c0_3 = arith.constant 0 : index
    %c0_4 = arith.constant 0 : index
    %4 = vector.load %arg3[%c0_3, %c0_4] : memref<1x128xf32, #tpu.memory_space<vmem>>, vector<1x128xf32>
    %5 = vector.broadcast %4 : vector<1x128xf32> to vector<8x128xf32>
    %6 = arith.addf %3, %5 : vector<8x128xf32>
    %cst_5 = arith.constant 0.000000e+00 : f32
    %7 = vector.broadcast %cst_5 : f32 to vector<8x128xf32>
    %8 = arith.maximumf %6, %7 : vector<8x128xf32>
    %9 = arith.truncf %8 : vector<8x128xf32> to vector<8x128xbf16>
    %c0_6 = arith.constant 0 : index
    %c0_7 = arith.constant 0 : index
    %10 = vector.load %arg4[%c0_6, %c0_7] : memref<128x128xbf16, #tpu.memory_space<vmem>>, vector<128x128xbf16>
    %cst_8 = arith.constant dense<0.000000e+00> : vector<8x128xf32>
    %11 = tpu.matmul %9, %10, %cst_8 {dimension_numbers = #tpu.dot_dimension_numbers<[1], [0], [0], [1], [0, 0, 1, 1], [], []>} : vector<8x128xbf16>, vector<128x128xbf16>, vector<8x128xf32> -> vector<8x128xf32>
    %c0_9 = arith.constant 0 : index
    %c0_10 = arith.constant 0 : index
    %12 = vector.load %arg5[%c0_9, %c0_10] : memref<1x128xf32, #tpu.memory_space<vmem>>, vector<1x128xf32>
    %13 = vector.broadcast %12 : vector<1x128xf32> to vector<8x128xf32>
    %14 = arith.addf %11, %13 : vector<8x128xf32>
    %c0_11 = arith.constant 0 : index
    %c0_12 = arith.constant 0 : index
    %15 = vector.load %arg1[%c0_11, %c0_12] : memref<8x128xf32, #tpu.memory_space<vmem>>, vector<8x128xf32>
    %16 = arith.addf %14, %15 : vector<8x128xf32>
    %cst_13 = arith.constant 0.000000e+00 : f32
    %17 = vector.broadcast %cst_13 : f32 to vector<8x128xf32>
    %18 = arith.maximumf %16, %17 : vector<8x128xf32>
    %c0_14 = arith.constant 0 : index
    %c0_15 = arith.constant 0 : index
    %19 = vector.load %arg6[%c0_14, %c0_15] : memref<8x128xf32, #tpu.memory_space<vmem>>, vector<8x128xf32>
    tpu.vector_store %arg6[%c0_14, %c0_15], %18 {strides = array<i32>} : memref<8x128xf32, #tpu.memory_space<vmem>>, vector<8x128xf32>,
    return
  }
  func.func @transform_0(%arg0: i32) -> (i32, i32) {
    %c0_i32 = arith.constant 0 : i32
    %c0_i32_0 = arith.constant 0 : i32
    return %arg0, %c0_i32 : i32, i32
  }
  func.func @transform_1(%arg0: i32) -> (i32, i32) {
    %c0_i32 = arith.constant 0 : i32
    %c0_i32_0 = arith.constant 0 : i32
    %c0_i32_1 = arith.constant 0 : i32
    return %c0_i32, %c0_i32_0 : i32, i32
  }
  func.func @transform_2(%arg0: i32) -> (i32, i32) {
    %c0_i32 = arith.constant 0 : i32
    %c0_i32_0 = arith.constant 0 : i32
    %c0_i32_1 = arith.constant 0 : i32
    return %c0_i32, %c0_i32_0 : i32, i32
  }
  func.func @transform_3(%arg0: i32) -> (i32, i32) {
    %c0_i32 = arith.constant 0 : i32
    %c0_i32_0 = arith.constant 0 : i32
    %c0_i32_1 = arith.constant 0 : i32
    return %c0_i32, %c0_i32_0 : i32, i32
  }
  func.func @transform_4(%arg0: i32) -> (i32, i32) {
    %c0_i32 = arith.constant 0 : i32
    %c0_i32_0 = arith.constant 0 : i32
    %c0_i32_1 = arith.constant 0 : i32
    return %c0_i32, %c0_i32_0 : i32, i32
  }
  func.func @transform_5(%arg0: i32) -> (i32, i32) {
    %c0_i32 = arith.constant 0 : i32
    %c0_i32_0 = arith.constant 0 : i32
    return %arg0, %c0_i32 : i32, i32
  }
}

module attributes {stable_mosaic.version = 11 : i64} {
  func.func @_resident_kernel(%arg0: i32, %arg1: memref<8x128xf32, #tpu.memory_space<vmem>>, %arg2: memref<128x128xbf16, #tpu.memory_space<vmem>>, %arg3: memref<1x128xf32, #tpu.memory_space<vmem>>, %arg4: memref<128x128xbf16, #tpu.memory_space<vmem>>, %arg5: memref<1x128xf32, #tpu.memory_space<vmem>>, %arg6: memref<8x128xf32, #tpu.memory_space<vmem>>) attributes {dimension_semantics = [#tpu.dimension_semantics<parallel>], iteration_bounds = array<i64: 1>, scalar_prefetch = 0 : i64, scratch_operands = 0 : i64, tpu.core_type = #tpu.core_type<tc>, window_params = [{transform_indices = @transform_0, window_bounds = array<i64: 8, 128>}, {pipeline_mode = #tpu.pipeline_mode<synchronous>, transform_indices = @transform_1, window_bounds = array<i64: 128, 128>}, {pipeline_mode = #tpu.pipeline_mode<synchronous>, transform_indices = @transform_2, window_bounds = array<i64: 1, 128>}, {pipeline_mode = #tpu.pipeline_mode<synchronous>, transform_indices = @transform_3, window_bounds = array<i64: 128, 128>}, {pipeline_mode = #tpu.pipeline_mode<synchronous>, transform_indices = @transform_4, window_bounds = array<i64: 1, 128>}, {transform_indices = @transform_5, window_bounds = array<i64: 8, 128>}]} {
    %c0 = arith.constant 0 : index
    %c0_0 = arith.constant 0 : index
    %0 = vector.load %arg1[%c0, %c0_0] : memref<8x128xf32, #tpu.memory_space<vmem>>, vector<8x128xf32>
    %1 = arith.truncf %0 : vector<8x128xf32> to vector<8x128xbf16>
    %c0_1 = arith.constant 0 : index
    %c0_2 = arith.constant 0 : index
    %2 = vector.load %arg2[%c0_1, %c0_2] : memref<128x128xbf16, #tpu.memory_space<vmem>>, vector<128x128xbf16>
    %cst = arith.constant dense<0.000000e+00> : vector<8x128xf32>
    %3 = tpu.matmul %1, %2, %cst {dimension_numbers = #tpu.dot_dimension_numbers<[1], [0], [0], [1], [0, 0, 1, 1], [], []>} : vector<8x128xbf16>, vector<128x128xbf16>, vector<8x128xf32> -> vector<8x128xf32>
    %c0_3 = arith.constant 0 : index
    %c0_4 = arith.constant 0 : index
    %4 = vector.load %arg3[%c0_3, %c0_4] : memref<1x128xf32, #tpu.memory_space<vmem>>, vector<1x128xf32>
    %5 = vector.broadcast %4 : vector<1x128xf32> to vector<8x128xf32>
    %6 = arith.addf %3, %5 : vector<8x128xf32>
    %cst_5 = arith.constant 0.000000e+00 : f32
    %7 = vector.broadcast %cst_5 : f32 to vector<8x128xf32>
    %8 = arith.maximumf %6, %7 : vector<8x128xf32>
    %9 = arith.truncf %8 : vector<8x128xf32> to vector<8x128xbf16>
    %c0_6 = arith.constant 0 : index
    %c0_7 = arith.constant 0 : index
    %10 = vector.load %arg4[%c0_6, %c0_7] : memref<128x128xbf16, #tpu.memory_space<vmem>>, vector<128x128xbf16>
    %cst_8 = arith.constant dense<0.000000e+00> : vector<8x128xf32>
    %11 = tpu.matmul %9, %10, %cst_8 {dimension_numbers = #tpu.dot_dimension_numbers<[1], [0], [0], [1], [0, 0, 1, 1], [], []>} : vector<8x128xbf16>, vector<128x128xbf16>, vector<8x128xf32> -> vector<8x128xf32>
    %c0_9 = arith.constant 0 : index
    %c0_10 = arith.constant 0 : index
    %12 = vector.load %arg5[%c0_9, %c0_10] : memref<1x128xf32, #tpu.memory_space<vmem>>, vector<1x128xf32>
    %13 = vector.broadcast %12 : vector<1x128xf32> to vector<8x128xf32>
    %14 = arith.addf %11, %13 : vector<8x128xf32>
    %c0_11 = arith.constant 0 : index
    %c0_12 = arith.constant 0 : index
    %15 = vector.load %arg1[%c0_11, %c0_12] : memref<8x128xf32, #tpu.memory_space<vmem>>, vector<8x128xf32>
    %16 = arith.addf %14, %15 : vector<8x128xf32>
    %cst_13 = arith.constant 0.000000e+00 : f32
    %17 = vector.broadcast %cst_13 : f32 to vector<8x128xf32>
    %18 = arith.maximumf %16, %17 : vector<8x128xf32>
    %c0_14 = arith.constant 0 : index
    %c0_15 = arith.constant 0 : index
    %19 = vector.load %arg6[%c0_14, %c0_15] : memref<8x128xf32, #tpu.memory_space<vmem>>, vector<8x128xf32>
    tpu.vector_store %arg6[%c0_14, %c0_15], %18 {strides = array<i32>} : memref<8x128xf32, #tpu.memory_space<vmem>>, vector<8x128xf32>,
    return
  }
  func.func @transform_0(%arg0: i32) -> (i32, i32) {
    %c0_i32 = arith.constant 0 : i32
    %c0_i32_0 = arith.constant 0 : i32
    return %arg0, %c0_i32 : i32, i32
  }
  func.func @transform_1(%arg0: i32) -> (i32, i32) {
    %c0_i32 = arith.constant 0 : i32
    %c0_i32_0 = arith.constant 0 : i32
    %c0_i32_1 = arith.constant 0 : i32
    return %c0_i32, %c0_i32_0 : i32, i32
  }
  func.func @transform_2(%arg0: i32) -> (i32, i32) {
    %c0_i32 = arith.constant 0 : i32
    %c0_i32_0 = arith.constant 0 : i32
    %c0_i32_1 = arith.constant 0 : i32
    return %c0_i32, %c0_i32_0 : i32, i32
  }
  func.func @transform_3(%arg0: i32) -> (i32, i32) {
    %c0_i32 = arith.constant 0 : i32
    %c0_i32_0 = arith.constant 0 : i32
    %c0_i32_1 = arith.constant 0 : i32
    return %c0_i32, %c0_i32_0 : i32, i32
  }
  func.func @transform_4(%arg0: i32) -> (i32, i32) {
    %c0_i32 = arith.constant 0 : i32
    %c0_i32_0 = arith.constant 0 : i32
    %c0_i32_1 = arith.constant 0 : i32
    return %c0_i32, %c0_i32_0 : i32, i32
  }
  func.func @transform_5(%arg0: i32) -> (i32, i32) {
    %c0_i32 = arith.constant 0 : i32
    %c0_i32_0 = arith.constant 0 : i32
    return %arg0, %c0_i32 : i32, i32
  }
}

</mosaic_0001>

<llo_original>
// kernel: tpu_custom_call.1
$region0: #{tpu_custom_call.1}
  #allocation0 [shape = 'u32[]', space=smem, size = 0x4, offset = 0x4, fixed_abs, tag = 'smem constant byte address 0x4 - core index']
  #allocation1 [shape = 'u32[144,128]{1,0:T(1,128)}', space=vmem, size = 0x12000, scoped, tag = 'internal scratch']
  %s0 = inlined_call_operand.hbm [shape: f32[8,128], index: 0, kind: input, shape index: {}]
  %s1 = inlined_call_operand.hbm [shape: bf16[128,128], index: 1, kind: input, shape index: {}]
  %s2 = inlined_call_operand.vmem [shape: f32[1,128], index: 2, kind: input, shape index: {}]
  %s3 = inlined_call_operand.hbm [shape: bf16[128,128], index: 3, kind: input, shape index: {}]
  %s4 = inlined_call_operand.vmem [shape: f32[1,128], index: 4, kind: input, shape index: {}]
  %s5 = inlined_call_operand.hbm [shape: f32[8,128], index: 5, kind: output, shape index: {}]
  %s6 = sld [smem:[#allocation0]]
  $region42: #{tpu_custom_call.1} parent=0
    _
  %s8 = ssub.s32 1, %s6
  %s9 = scalar_select 0, %s8, %s6
  $region1: #{tpu_custom_call.1} parent=0
    #allocation2 [shape = 'u8[4096]{0}', space=vmem, size = 0x1000, scoped, tag = 'input window, operand 0, single buffered']
    #allocation3 [shape = 's32[1]{0}', space=sflag, size = 0x4, scoped, tag = 'scoped memory for tpu_custom_call.1']
    #allocation4 [shape = 's32[1]{0}', space=sflag, size = 0x4, scoped, tag = 'scoped memory for tpu_custom_call.1']
    #allocation5 [shape = 'u8[32768]{0}', space=vmem, size = 0x8000, scoped, tag = 'input window, operand 1, single buffered']
    #allocation6 [shape = 's32[1]{0}', space=sflag, size = 0x4, scoped, tag = 'scoped memory for tpu_custom_call.1']
    #allocation7 [shape = 'u8[32768]{0}', space=vmem, size = 0x8000, scoped, tag = 'input window, operand 3, single buffered']
    #allocation8 [shape = 'u8[4096]{0}', space=vmem, size = 0x1000, scoped, tag = 'output window, operand 0, single buffered']
    %10 = vsyncpa [#allocation3], 0
    %11 = vsyncpa [#allocation6], 0
    %12 = vsyncpa [#allocation4], 0
    // Predicated region
    $region2: #{tpu_custom_call.1} parent=1 // pred_check
      _
    $region3: #{tpu_custom_call.1} parent=1 // pred_check_branch
      %14 = sbr.rel (0) target = $region5
    $region4: #{tpu_custom_call.1} parent=1 // pred_region
      %s16 = ssub.s32 128, 128
      %17 = vsyncadd [#allocation3], %s16
      %s19 = sshll.u32 [#allocation2], 4
      %s20 = int_to_ptr.vmem [resolvable:$true] %s19
      %22 = dma.hbm_to_vmem [thread:$0]  %s0, 128, %s20, [#allocation3]
    $region5: #{tpu_custom_call.1} parent=1 // pred_fallthru
      _
    // Predicated region
    $region6: #{tpu_custom_call.1} parent=1 // pred_check
      _
    $region7: #{tpu_custom_call.1} parent=1 // pred_check_branch
      %24 = sbr.rel (0) target = $region9
    $region8: #{tpu_custom_call.1} parent=1 // pred_region
      %s26 = ssub.s32 1024, 1024
      %27 = vsyncadd [#allocation6], %s26
      %s28 = sshll.u32 [#allocation5], 4
      %s29 = int_to_ptr.vmem [resolvable:$true] %s28
      %34 = dma.hbm_to_vmem [thread:$0]  %s1, 1024, %s29, [#allocation6], 64, 64, 4
    $region9: #{tpu_custom_call.1} parent=1 // pred_fallthru
      _
    // Predicated region
    $region10: #{tpu_custom_call.1} parent=1 // pred_check
      _
    $region11: #{tpu_custom_call.1} parent=1 // pred_check_branch
      %36 = sbr.rel (0) target = $region13
    $region12: #{tpu_custom_call.1} parent=1 // pred_region
      _
    $region13: #{tpu_custom_call.1} parent=1 // pred_fallthru
      _
    // Predicated region
    $region14: #{tpu_custom_call.1} parent=1 // pred_check
      _
    $region15: #{tpu_custom_call.1} parent=1 // pred_check_branch
      %38 = sbr.rel (0) target = $region17
    $region16: #{tpu_custom_call.1} parent=1 // pred_region
      %s40 = ssub.s32 1024, 1024
      %41 = vsyncadd [#allocation6], %s40
      %s42 = sshll.u32 [#allocation7], 4
      %s43 = int_to_ptr.vmem [resolvable:$true] %s42
      %48 = dma.hbm_to_vmem [thread:$0]  %s3, 1024, %s43, [#allocation6], 64, 64, 4
    $region17: #{tpu_custom_call.1} parent=1 // pred_fallthru
      _
    // Predicated region
    $region18: #{tpu_custom_call.1} parent=1 // pred_check
      _
    $region19: #{tpu_custom_call.1} parent=1 // pred_check_branch
      %50 = sbr.rel (0) target = $region21
    $region20: #{tpu_custom_call.1} parent=1 // pred_region
      _
    $region21: #{tpu_custom_call.1} parent=1 // pred_fallthru
      _
    // Predicated region
    $region22: #{tpu_custom_call.1} parent=1 // pred_check
      _
    $region23: #{tpu_custom_call.1} parent=1 // pred_check_branch
      %52 = sbr.rel (0) target = $region25
    $region24: #{tpu_custom_call.1} parent=1 // pred_region
      %53 = dma.done [#allocation3], 128
    $region25: #{tpu_custom_call.1} parent=1 // pred_fallthru
      _
    // Predicated region
    $region26: #{tpu_custom_call.1} parent=1 // pred_check
      _
    $region27: #{tpu_custom_call.1} parent=1 // pred_check_branch
      %55 = sbr.rel (0) target = $region29
    $region28: #{tpu_custom_call.1} parent=1 // pred_region
      %56 = dma.done [#allocation6], 1024
    $region29: #{tpu_custom_call.1} parent=1 // pred_fallthru
      _
    // Predicated region
    $region30: #{tpu_custom_call.1} parent=1 // pred_check
      _
    $region31: #{tpu_custom_call.1} parent=1 // pred_check_branch
      %58 = sbr.rel (0) target = $region33
    $region32: #{tpu_custom_call.1} parent=1 // pred_region
      %59 = dma.done [#allocation6], 1024
    $region33: #{tpu_custom_call.1} parent=1 // pred_fallthru
      _
    %v61 = vld [vmem:[#allocation2] sm:$0xff]
    %v62 = vpack.c.bf16 %v61, %v61
    %v63 = vld [vmem:[#allocation5] sm:$0xf]
    %v64 = vld [vmem:[#allocation5 + $0x4] sm:$0xf]
    %v65 = vld [vmem:[#allocation5 + $0x8] sm:$0xf]
    %v66 = vld [vmem:[#allocation5 + $0xc] sm:$0xf]
    %v67 = vld [vmem:[#allocation5 + $0x10] sm:$0xf]
    %v68 = vld [vmem:[#allocation5 + $0x14] sm:$0xf]
    %v69 = vld [vmem:[#allocation5 + $0x18] sm:$0xf]
    %v70 = vld [vmem:[#allocation5 + $0x1c] sm:$0xf]
    %v71 = vld [vmem:[#allocation5 + $0x20] sm:$0xf]
    %v72 = vld [vmem:[#allocation5 + $0x24] sm:$0xf]
    %v73 = vld [vmem:[#allocation5 + $0x28] sm:$0xf]
    %v74 = vld [vmem:[#allocation5 + $0x2c] sm:$0xf]
    %v75 = vld [vmem:[#allocation5 + $0x30] sm:$0xf]
    %v76 = vld [vmem:[#allocation5 + $0x34] sm:$0xf]
    %v77 = vld [vmem:[#allocation5 + $0x38] sm:$0xf]
    %v78 = vld [vmem:[#allocation5 + $0x3c] sm:$0xf]
    %v79 = vld [vmem:[%s2] sm:$0x1]
    %v81 = vlaneseq
    %v82 = vshrl.u32 %v81, 7
    %v83 = vsub.s32 0, %v82
    %v84 = vrot.slane %v79, %v83
    %v102 = vunpack.c.l.b16 %v63
    %v103 = vunpack.c.l.b16 %v64
    %v104 = vunpack.c.l.b16 %v65
    %v105 = vunpack.c.l.b16 %v66
    %v106 = vunpack.c.l.b16 %v67
    %v107 = vunpack.c.l.b16 %v68
    %v108 = vunpack.c.l.b16 %v69
    %v109 = vunpack.c.l.b16 %v70
    %v110 = vunpack.c.l.b16 %v71
    %v111 = vunpack.c.l.b16 %v72
    %v112 = vunpack.c.l.b16 %v73
    %v113 = vunpack.c.l.b16 %v74
    %v114 = vunpack.c.l.b16 %v75
    %v115 = vunpack.c.l.b16 %v76
    %v116 = vunpack.c.l.b16 %v77
    %v117 = vunpack.c.l.b16 %v78
    %v118 = vpack.c.b16 %v103, %v102
    %v119 = vpack.c.b16 %v105, %v104
    %v120 = vpack.c.b16 %v107, %v106
    %v121 = vpack.c.b16 %v109, %v108
    %v122 = vpack.c.b16 %v111, %v110
    %v123 = vpack.c.b16 %v113, %v112
    %v124 = vpack.c.b16 %v115, %v114
    %v125 = vpack.c.b16 %v117, %v116
    %134 = vmatprep.subr.bf16.mxu0 0
    %135 = vmatpush1.bf16.msra.mxu0 %v125
    %136 = vmatprep.subr.bf16.mxu0 0
    %137 = vmatpush1.bf16.msra.mxu0 %v124
    %138 = vmatprep.subr.bf16.mxu0 0
    %139 = vmatpush1.bf16.msra.mxu0 %v123
    %140 = vmatprep.subr.bf16.mxu0 0
    %141 = vmatpush1.bf16.msra.mxu0 %v122
    %142 = vmatprep.subr.bf16.mxu0 0
    %143 = vmatpush1.bf16.msra.mxu0 %v121
    %144 = vmatprep.subr.bf16.mxu0 0
    %145 = vmatpush1.bf16.msra.mxu0 %v120
    %146 = vmatprep.subr.bf16.mxu0 0
    %147 = vmatpush1.bf16.msra.mxu0 %v119
    %148 = vmatprep.subr.bf16.mxu0 0
    %149 = vmatpush1.bf16.msra.mxu0 %v118
    %150 = vmatprep.subr.bf16.mxu0 0
    %151 = vmatpush2.bf16.msra.mxu0 0
    %152 = vmatprep.subr.bf16.mxu0 0
    %153 = vmatpush2.bf16.msra.mxu0 0
    %154 = vmatprep.subr.bf16.mxu0 0
    %155 = vmatpush2.bf16.msra.mxu0 0
    %156 = vmatprep.subr.bf16.mxu0 0
    %157 = vmatpush2.bf16.msra.mxu0 0
    %158 = vmatprep.subr.bf16.mxu0 0
    %159 = vmatpush2.bf16.msra.mxu0 0
    %160 = vmatprep.subr.bf16.mxu0 0
    %161 = vmatpush2.bf16.msra.mxu0 0
    %162 = vmatprep.subr.bf16.mxu0 0
    %163 = vmatpush2.bf16.msra.mxu0 0
    %164 = vmatprep.subr.bf16.mxu0 0
    %165 = vmatpush2.bf16.msra.mxu0 0
    %166 = vmatprep.mubr.bf16.mxu0 0
    %167 = vmatmul.mubr.bf16.gmra.mxu0 %v62
    %v168 = vpop.f32.mrf.mxu0
    %v169 = vadd.f32 %v84, %v168
    %v170 = vpop.f32.mrf.mxu0
    %v171 = vpop.f32.mrf.mxu0
    %v172 = vpop.f32.mrf.mxu0
    %173 = vdwg.mxu0
    %v174 = vmax.f32 %v169, 0.0
    %v175 = vpack.c.bf16 %v174, %v174
    %v176 = vld [vmem:[#allocation7] sm:$0xf]
    %v177 = vld [vmem:[#allocation7 + $0x4] sm:$0xf]
    %v178 = vld [vmem:[#allocation7 + $0x8] sm:$0xf]
    %v179 = vld [vmem:[#allocation7 + $0xc] sm:$0xf]
    %v180 = vld [vmem:[#allocation7 + $0x10] sm:$0xf]
    %v181 = vld [vmem:[#allocation7 + $0x14] sm:$0xf]
    %v182 = vld [vmem:[#allocation7 + $0x18] sm:$0xf]
    %v183 = vld [vmem:[#allocation7 + $0x1c] sm:$0xf]
    %v184 = vld [vmem:[#allocation7 + $0x20] sm:$0xf]
    %v185 = vld [vmem:[#allocation7 + $0x24] sm:$0xf]
    %v186 = vld [vmem:[#allocation7 + $0x28] sm:$0xf]
    %v187 = vld [vmem:[#allocation7 + $0x2c] sm:$0xf]
    %v188 = vld [vmem:[#allocation7 + $0x30] sm:$0xf]
    %v189 = vld [vmem:[#allocation7 + $0x34] sm:$0xf]
    %v190 = vld [vmem:[#allocation7 + $0x38] sm:$0xf]
    %v191 = vld [vmem:[#allocation7 + $0x3c] sm:$0xf]
    %v192 = vld [vmem:[%s4] sm:$0x1]
    %v194 = vlaneseq
    %v195 = vshrl.u32 %v194, 7
    %v196 = vsub.s32 0, %v195
    %v197 = vrot.slane %v192, %v196
    %v215 = vunpack.c.l.b16 %v176
    %v216 = vunpack.c.l.b16 %v177
    %v217 = vunpack.c.l.b16 %v178
    %v218 = vunpack.c.l.b16 %v179
    %v219 = vunpack.c.l.b16 %v180
    %v220 = vunpack.c.l.b16 %v181
    %v221 = vunpack.c.l.b16 %v182
    %v222 = vunpack.c.l.b16 %v183
    %v223 = vunpack.c.l.b16 %v184
    %v224 = vunpack.c.l.b16 %v185
    %v225 = vunpack.c.l.b16 %v186
    %v226 = vunpack.c.l.b16 %v187
    %v227 = vunpack.c.l.b16 %v188
    %v228 = vunpack.c.l.b16 %v189
    %v229 = vunpack.c.l.b16 %v190
    %v230 = vunpack.c.l.b16 %v191
    %v231 = vpack.c.b16 %v216, %v215
    %v232 = vpack.c.b16 %v218, %v217
    %v233 = vpack.c.b16 %v220, %v219
    %v234 = vpack.c.b16 %v222, %v221
    %v235 = vpack.c.b16 %v224, %v223
    %v236 = vpack.c.b16 %v226, %v225
    %v237 = vpack.c.b16 %v228, %v227
    %v238 = vpack.c.b16 %v230, %v229
    %247 = vmatprep.subr.bf16.mxu0 0
    %248 = vmatpush1.bf16.msra.mxu0 %v238
    %249 = vmatprep.subr.bf16.mxu0 0
    %250 = vmatpush1.bf16.msra.mxu0 %v237
    %251 = vmatprep.subr.bf16.mxu0 0
    %252 = vmatpush1.bf16.msra.mxu0 %v236
    %253 = vmatprep.subr.bf16.mxu0 0
    %254 = vmatpush1.bf16.msra.mxu0 %v235
    %255 = vmatprep.subr.bf16.mxu0 0
    %256 = vmatpush1.bf16.msra.mxu0 %v234
    %257 = vmatprep.subr.bf16.mxu0 0
    %258 = vmatpush1.bf16.msra.mxu0 %v233
    %259 = vmatprep.subr.bf16.mxu0 0
    %260 = vmatpush1.bf16.msra.mxu0 %v232
    %261 = vmatprep.subr.bf16.mxu0 0
    %262 = vmatpush1.bf16.msra.mxu0 %v231
    %263 = vmatprep.subr.bf16.mxu0 0
    %264 = vmatpush2.bf16.msra.mxu0 0
    %265 = vmatprep.subr.bf16.mxu0 0
    %266 = vmatpush2.bf16.msra.mxu0 0
    %267 = vmatprep.subr.bf16.mxu0 0
    %268 = vmatpush2.bf16.msra.mxu0 0
    %269 = vmatprep.subr.bf16.mxu0 0
    %270 = vmatpush2.bf16.msra.mxu0 0
    %271 = vmatprep.subr.bf16.mxu0 0
    %272 = vmatpush2.bf16.msra.mxu0 0
    %273 = vmatprep.subr.bf16.mxu0 0
    %274 = vmatpush2.bf16.msra.mxu0 0
    %275 = vmatprep.subr.bf16.mxu0 0
    %276 = vmatpush2.bf16.msra.mxu0 0
    %277 = vmatprep.subr.bf16.mxu0 0
    %278 = vmatpush2.bf16.msra.mxu0 0
    %279 = vmatprep.mubr.bf16.mxu0 0
    %280 = vmatmul.mubr.bf16.gmra.mxu0 %v175
    %v281 = vpop.f32.mrf.mxu0
    %v282 = vadd.f32 %v197, %v281
    %v283 = vpop.f32.mrf.mxu0
    %v284 = vpop.f32.mrf.mxu0
    %v285 = vpop.f32.mrf.mxu0
    %286 = vdwg.mxu0
    %v287 = vadd.f32 %v282, %v61
    %v288 = vmax.f32 %v287, 0.0
    %289 = vst [vmem:[#allocation8] sm:$0xff] %v288
    // Predicated region
    $region34: #{tpu_custom_call.1} parent=1 // pred_check
      _
    $region35: #{tpu_custom_call.1} parent=1 // pred_check_branch
      %291 = sbr.rel (0) target = $region37
    $region36: #{tpu_custom_call.1} parent=1 // pred_region
      %s293 = ssub.s32 128, 128
      %294 = vsyncadd [#allocation4], %s293
      %s296 = sshll.u32 [#allocation8], 4
      %s297 = int_to_ptr.vmem [resolvable:$true] %s296
      %299 = dma.vmem_to_hbm [thread:$0]  %s297, 128, %s5, [#allocation4]
    $region37: #{tpu_custom_call.1} parent=1 // pred_fallthru
      _
    // Predicated region
    $region38: #{tpu_custom_call.1} parent=1 // pred_check
      _
    $region39: #{tpu_custom_call.1} parent=1 // pred_check_branch
      %301 = sbr.rel (0) target = $region41
    $region40: #{tpu_custom_call.1} parent=1 // pred_region
      %302 = dma.done [#allocation4], 128
    $region41: #{tpu_custom_call.1} parent=1 // pred_fallthru
      _
    %303 = vsyncpa [#allocation3], 1
    %304 = vsyncpa [#allocation6], 1
    %305 = vsyncpa [#allocation4], 1

// kernel: tpu_custom_call.1
$region0: #{tpu_custom_call.1}
  #allocation0 [shape = 'u32[]', space=smem, size = 0x4, offset = 0x4, fixed_abs, tag = 'smem constant byte address 0x4 - core index']
  #allocation1 [shape = 'u32[144,128]{1,0:T(1,128)}', space=vmem, size = 0x12000, scoped, tag = 'internal scratch']
  %s0 = inlined_call_operand.hbm [shape: f32[8,128], index: 0, kind: input, shape index: {}]
  %s1 = inlined_call_operand.hbm [shape: bf16[128,128], index: 1, kind: input, shape index: {}]
  %s2 = inlined_call_operand.vmem [shape: f32[1,128], index: 2, kind: input, shape index: {}]
  %s3 = inlined_call_operand.hbm [shape: bf16[128,128], index: 3, kind: input, shape index: {}]
  %s4 = inlined_call_operand.vmem [shape: f32[1,128], index: 4, kind: input, shape index: {}]
  %s5 = inlined_call_operand.hbm [shape: f32[8,128], index: 5, kind: output, shape index: {}]
  %s6 = sld [smem:[#allocation0]]
  $region42: #{tpu_custom_call.1} parent=0
    _
  %s8 = ssub.s32 1, %s6
  %s9 = scalar_select 0, %s8, %s6
  $region1: #{tpu_custom_call.1} parent=0
    #allocation2 [shape = 'u8[4096]{0}', space=vmem, size = 0x1000, scoped, tag = 'input window, operand 0, single buffered']
    #allocation3 [shape = 's32[1]{0}', space=sflag, size = 0x4, scoped, tag = 'scoped memory for tpu_custom_call.1']
    #allocation4 [shape = 's32[1]{0}', space=sflag, size = 0x4, scoped, tag = 'scoped memory for tpu_custom_call.1']
    #allocation5 [shape = 'u8[32768]{0}', space=vmem, size = 0x8000, scoped, tag = 'input window, operand 1, single buffered']
    #allocation6 [shape = 's32[1]{0}', space=sflag, size = 0x4, scoped, tag = 'scoped memory for tpu_custom_call.1']
    #allocation7 [shape = 'u8[32768]{0}', space=vmem, size = 0x8000, scoped, tag = 'input window, operand 3, single buffered']
    #allocation8 [shape = 'u8[4096]{0}', space=vmem, size = 0x1000, scoped, tag = 'output window, operand 0, single buffered']
    %10 = vsyncpa [#allocation3], 0
    %11 = vsyncpa [#allocation6], 0
    %12 = vsyncpa [#allocation4], 0
    // Predicated region
    $region2: #{tpu_custom_call.1} parent=1 // pred_check
      _
    $region3: #{tpu_custom_call.1} parent=1 // pred_check_branch
      %14 = sbr.rel (0) target = $region5
    $region4: #{tpu_custom_call.1} parent=1 // pred_region
      %s16 = ssub.s32 128, 128
      %17 = vsyncadd [#allocation3], %s16
      %s19 = sshll.u32 [#allocation2], 4
      %s20 = int_to_ptr.vmem [resolvable:$true] %s19
      %22 = dma.hbm_to_vmem [thread:$0]  %s0, 128, %s20, [#allocation3]
    $region5: #{tpu_custom_call.1} parent=1 // pred_fallthru
      _
    // Predicated region
    $region6: #{tpu_custom_call.1} parent=1 // pred_check
      _
    $region7: #{tpu_custom_call.1} parent=1 // pred_check_branch
      %24 = sbr.rel (0) target = $region9
    $region8: #{tpu_custom_call.1} parent=1 // pred_region
      %s26 = ssub.s32 1024, 1024
      %27 = vsyncadd [#allocation6], %s26
      %s28 = sshll.u32 [#allocation5], 4
      %s29 = int_to_ptr.vmem [resolvable:$true] %s28
      %34 = dma.hbm_to_vmem [thread:$0]  %s1, 1024, %s29, [#allocation6], 64, 64, 4
    $region9: #{tpu_custom_call.1} parent=1 // pred_fallthru
      _
    // Predicated region
    $region10: #{tpu_custom_call.1} parent=1 // pred_check
      _
    $region11: #{tpu_custom_call.1} parent=1 // pred_check_branch
      %36 = sbr.rel (0) target = $region13
    $region12: #{tpu_custom_call.1} parent=1 // pred_region
      _
    $region13: #{tpu_custom_call.1} parent=1 // pred_fallthru
      _
    // Predicated region
    $region14: #{tpu_custom_call.1} parent=1 // pred_check
      _
    $region15: #{tpu_custom_call.1} parent=1 // pred_check_branch
      %38 = sbr.rel (0) target = $region17
    $region16: #{tpu_custom_call.1} parent=1 // pred_region
      %s40 = ssub.s32 1024, 1024
      %41 = vsyncadd [#allocation6], %s40
      %s42 = sshll.u32 [#allocation7], 4
      %s43 = int_to_ptr.vmem [resolvable:$true] %s42
      %48 = dma.hbm_to_vmem [thread:$0]  %s3, 1024, %s43, [#allocation6], 64, 64, 4
    $region17: #{tpu_custom_call.1} parent=1 // pred_fallthru
      _
    // Predicated region
    $region18: #{tpu_custom_call.1} parent=1 // pred_check
      _
    $region19: #{tpu_custom_call.1} parent=1 // pred_check_branch
      %50 = sbr.rel (0) target = $region21
    $region20: #{tpu_custom_call.1} parent=1 // pred_region
      _
    $region21: #{tpu_custom_call.1} parent=1 // pred_fallthru
      _
    // Predicated region
    $region22: #{tpu_custom_call.1} parent=1 // pred_check
      _
    $region23: #{tpu_custom_call.1} parent=1 // pred_check_branch
      %52 = sbr.rel (0) target = $region25
    $region24: #{tpu_custom_call.1} parent=1 // pred_region
      %53 = dma.done [#allocation3], 128
    $region25: #{tpu_custom_call.1} parent=1 // pred_fallthru
      _
    // Predicated region
    $region26: #{tpu_custom_call.1} parent=1 // pred_check
      _
    $region27: #{tpu_custom_call.1} parent=1 // pred_check_branch
      %55 = sbr.rel (0) target = $region29
    $region28: #{tpu_custom_call.1} parent=1 // pred_region
      %56 = dma.done [#allocation6], 1024
    $region29: #{tpu_custom_call.1} parent=1 // pred_fallthru
      _
    // Predicated region
    $region30: #{tpu_custom_call.1} parent=1 // pred_check
      _
    $region31: #{tpu_custom_call.1} parent=1 // pred_check_branch
      %58 = sbr.rel (0) target = $region33
    $region32: #{tpu_custom_call.1} parent=1 // pred_region
      %59 = dma.done [#allocation6], 1024
    $region33: #{tpu_custom_call.1} parent=1 // pred_fallthru
      _
    %v61 = vld [vmem:[#allocation2] sm:$0xff]
    %v62 = vpack.c.bf16 %v61, %v61
    %v63 = vld [vmem:[#allocation5] sm:$0xf]
    %v64 = vld [vmem:[#allocation5 + $0x4] sm:$0xf]
    %v65 = vld [vmem:[#allocation5 + $0x8] sm:$0xf]
    %v66 = vld [vmem:[#allocation5 + $0xc] sm:$0xf]
    %v67 = vld [vmem:[#allocation5 + $0x10] sm:$0xf]
    %v68 = vld [vmem:[#allocation5 + $0x14] sm:$0xf]
    %v69 = vld [vmem:[#allocation5 + $0x18] sm:$0xf]
    %v70 = vld [vmem:[#allocation5 + $0x1c] sm:$0xf]
    %v71 = vld [vmem:[#allocation5 + $0x20] sm:$0xf]
    %v72 = vld [vmem:[#allocation5 + $0x24] sm:$0xf]
    %v73 = vld [vmem:[#allocation5 + $0x28] sm:$0xf]
    %v74 = vld [vmem:[#allocation5 + $0x2c] sm:$0xf]
    %v75 = vld [vmem:[#allocation5 + $0x30] sm:$0xf]
    %v76 = vld [vmem:[#allocation5 + $0x34] sm:$0xf]
    %v77 = vld [vmem:[#allocation5 + $0x38] sm:$0xf]
    %v78 = vld [vmem:[#allocation5 + $0x3c] sm:$0xf]
    %v79 = vld [vmem:[%s2] sm:$0x1]
    %v81 = vlaneseq
    %v82 = vshrl.u32 %v81, 7
    %v83 = vsub.s32 0, %v82
    %v84 = vrot.slane %v79, %v83
    %v102 = vunpack.c.l.b16 %v63
    %v103 = vunpack.c.l.b16 %v64
    %v104 = vunpack.c.l.b16 %v65
    %v105 = vunpack.c.l.b16 %v66
    %v106 = vunpack.c.l.b16 %v67
    %v107 = vunpack.c.l.b16 %v68
    %v108 = vunpack.c.l.b16 %v69
    %v109 = vunpack.c.l.b16 %v70
    %v110 = vunpack.c.l.b16 %v71
    %v111 = vunpack.c.l.b16 %v72
    %v112 = vunpack.c.l.b16 %v73
    %v113 = vunpack.c.l.b16 %v74
    %v114 = vunpack.c.l.b16 %v75
    %v115 = vunpack.c.l.b16 %v76
    %v116 = vunpack.c.l.b16 %v77
    %v117 = vunpack.c.l.b16 %v78
    %v118 = vpack.c.b16 %v103, %v102
    %v119 = vpack.c.b16 %v105, %v104
    %v120 = vpack.c.b16 %v107, %v106
    %v121 = vpack.c.b16 %v109, %v108
    %v122 = vpack.c.b16 %v111, %v110
    %v123 = vpack.c.b16 %v113, %v112
    %v124 = vpack.c.b16 %v115, %v114
    %v125 = vpack.c.b16 %v117, %v116
    %134 = vmatprep.subr.bf16.mxu0 0
    %135 = vmatpush1.bf16.msra.mxu0 %v125
    %136 = vmatprep.subr.bf16.mxu0 0
    %137 = vmatpush1.bf16.msra.mxu0 %v124
    %138 = vmatprep.subr.bf16.mxu0 0
    %139 = vmatpush1.bf16.msra.mxu0 %v123
    %140 = vmatprep.subr.bf16.mxu0 0
    %141 = vmatpush1.bf16.msra.mxu0 %v122
    %142 = vmatprep.subr.bf16.mxu0 0
    %143 = vmatpush1.bf16.msra.mxu0 %v121
    %144 = vmatprep.subr.bf16.mxu0 0
    %145 = vmatpush1.bf16.msra.mxu0 %v120
    %146 = vmatprep.subr.bf16.mxu0 0
    %147 = vmatpush1.bf16.msra.mxu0 %v119
    %148 = vmatprep.subr.bf16.mxu0 0
    %149 = vmatpush1.bf16.msra.mxu0 %v118
    %150 = vmatprep.subr.bf16.mxu0 0
    %151 = vmatpush2.bf16.msra.mxu0 0
    %152 = vmatprep.subr.bf16.mxu0 0
    %153 = vmatpush2.bf16.msra.mxu0 0
    %154 = vmatprep.subr.bf16.mxu0 0
    %155 = vmatpush2.bf16.msra.mxu0 0
    %156 = vmatprep.subr.bf16.mxu0 0
    %157 = vmatpush2.bf16.msra.mxu0 0
    %158 = vmatprep.subr.bf16.mxu0 0
    %159 = vmatpush2.bf16.msra.mxu0 0
    %160 = vmatprep.subr.bf16.mxu0 0
    %161 = vmatpush2.bf16.msra.mxu0 0
    %162 = vmatprep.subr.bf16.mxu0 0
    %163 = vmatpush2.bf16.msra.mxu0 0
    %164 = vmatprep.subr.bf16.mxu0 0
    %165 = vmatpush2.bf16.msra.mxu0 0
    %166 = vmatprep.mubr.bf16.mxu0 0
    %167 = vmatmul.mubr.bf16.gmra.mxu0 %v62
    %v168 = vpop.f32.mrf.mxu0
    %v169 = vadd.f32 %v84, %v168
    %v170 = vpop.f32.mrf.mxu0
    %v171 = vpop.f32.mrf.mxu0
    %v172 = vpop.f32.mrf.mxu0
    %173 = vdwg.mxu0
    %v174 = vmax.f32 %v169, 0.0
    %v175 = vpack.c.bf16 %v174, %v174
    %v176 = vld [vmem:[#allocation7] sm:$0xf]
    %v177 = vld [vmem:[#allocation7 + $0x4] sm:$0xf]
    %v178 = vld [vmem:[#allocation7 + $0x8] sm:$0xf]
    %v179 = vld [vmem:[#allocation7 + $0xc] sm:$0xf]
    %v180 = vld [vmem:[#allocation7 + $0x10] sm:$0xf]
    %v181 = vld [vmem:[#allocation7 + $0x14] sm:$0xf]
    %v182 = vld [vmem:[#allocation7 + $0x18] sm:$0xf]
    %v183 = vld [vmem:[#allocation7 + $0x1c] sm:$0xf]
    %v184 = vld [vmem:[#allocation7 + $0x20] sm:$0xf]
    %v185 = vld [vmem:[#allocation7 + $0x24] sm:$0xf]
    %v186 = vld [vmem:[#allocation7 + $0x28] sm:$0xf]
    %v187 = vld [vmem:[#allocation7 + $0x2c] sm:$0xf]
    %v188 = vld [vmem:[#allocation7 + $0x30] sm:$0xf]
    %v189 = vld [vmem:[#allocation7 + $0x34] sm:$0xf]
    %v190 = vld [vmem:[#allocation7 + $0x38] sm:$0xf]
    %v191 = vld [vmem:[#allocation7 + $0x3c] sm:$0xf]
    %v192 = vld [vmem:[%s4] sm:$0x1]
    %v194 = vlaneseq
    %v195 = vshrl.u32 %v194, 7
    %v196 = vsub.s32 0, %v195
    %v197 = vrot.slane %v192, %v196
    %v215 = vunpack.c.l.b16 %v176
    %v216 = vunpack.c.l.b16 %v177
    %v217 = vunpack.c.l.b16 %v178
    %v218 = vunpack.c.l.b16 %v179
    %v219 = vunpack.c.l.b16 %v180
    %v220 = vunpack.c.l.b16 %v181
    %v221 = vunpack.c.l.b16 %v182
    %v222 = vunpack.c.l.b16 %v183
    %v223 = vunpack.c.l.b16 %v184
    %v224 = vunpack.c.l.b16 %v185
    %v225 = vunpack.c.l.b16 %v186
    %v226 = vunpack.c.l.b16 %v187
    %v227 = vunpack.c.l.b16 %v188
    %v228 = vunpack.c.l.b16 %v189
    %v229 = vunpack.c.l.b16 %v190
    %v230 = vunpack.c.l.b16 %v191
    %v231 = vpack.c.b16 %v216, %v215
    %v232 = vpack.c.b16 %v218, %v217
    %v233 = vpack.c.b16 %v220, %v219
    %v234 = vpack.c.b16 %v222, %v221
    %v235 = vpack.c.b16 %v224, %v223
    %v236 = vpack.c.b16 %v226, %v225
    %v237 = vpack.c.b16 %v228, %v227
    %v238 = vpack.c.b16 %v230, %v229
    %247 = vmatprep.subr.bf16.mxu0 0
    %248 = vmatpush1.bf16.msra.mxu0 %v238
    %249 = vmatprep.subr.bf16.mxu0 0
    %250 = vmatpush1.bf16.msra.mxu0 %v237
    %251 = vmatprep.subr.bf16.mxu0 0
    %252 = vmatpush1.bf16.msra.mxu0 %v236
    %253 = vmatprep.subr.bf16.mxu0 0
    %254 = vmatpush1.bf16.msra.mxu0 %v235
    %255 = vmatprep.subr.bf16.mxu0 0
    %256 = vmatpush1.bf16.msra.mxu0 %v234
    %257 = vmatprep.subr.bf16.mxu0 0
    %258 = vmatpush1.bf16.msra.mxu0 %v233
    %259 = vmatprep.subr.bf16.mxu0 0
    %260 = vmatpush1.bf16.msra.mxu0 %v232
    %261 = vmatprep.subr.bf16.mxu0 0
    %262 = vmatpush1.bf16.msra.mxu0 %v231
    %263 = vmatprep.subr.bf16.mxu0 0
    %264 = vmatpush2.bf16.msra.mxu0 0
    %265 = vmatprep.subr.bf16.mxu0 0
    %266 = vmatpush2.bf16.msra.mxu0 0
    %267 = vmatprep.subr.bf16.mxu0 0
    %268 = vmatpush2.bf16.msra.mxu0 0
    %269 = vmatprep.subr.bf16.mxu0 0
    %270 = vmatpush2.bf16.msra.mxu0 0
    %271 = vmatprep.subr.bf16.mxu0 0
    %272 = vmatpush2.bf16.msra.mxu0 0
    %273 = vmatprep.subr.bf16.mxu0 0
    %274 = vmatpush2.bf16.msra.mxu0 0
    %275 = vmatprep.subr.bf16.mxu0 0
    %276 = vmatpush2.bf16.msra.mxu0 0
    %277 = vmatprep.subr.bf16.mxu0 0
    %278 = vmatpush2.bf16.msra.mxu0 0
    %279 = vmatprep.mubr.bf16.mxu0 0
    %280 = vmatmul.mubr.bf16.gmra.mxu0 %v175
    %v281 = vpop.f32.mrf.mxu0
    %v282 = vadd.f32 %v197, %v281
    %v283 = vpop.f32.mrf.mxu0
    %v284 = vpop.f32.mrf.mxu0
    %v285 = vpop.f32.mrf.mxu0
    %286 = vdwg.mxu0
    %v287 = vadd.f32 %v282, %v61
    %v288 = vmax.f32 %v287, 0.0
    %289 = vst [vmem:[#allocation8] sm:$0xff] %v288
    // Predicated region
    $region34: #{tpu_custom_call.1} parent=1 // pred_check
      _
    $region35: #{tpu_custom_call.1} parent=1 // pred_check_branch
      %291 = sbr.rel (0) target = $region37
    $region36: #{tpu_custom_call.1} parent=1 // pred_region
      %s293 = ssub.s32 128, 128
      %294 = vsyncadd [#allocation4], %s293
      %s296 = sshll.u32 [#allocation8], 4
      %s297 = int_to_ptr.vmem [resolvable:$true] %s296
      %299 = dma.vmem_to_hbm [thread:$0]  %s297, 128, %s5, [#allocation4]
    $region37: #{tpu_custom_call.1} parent=1 // pred_fallthru
      _
    // Predicated region
    $region38: #{tpu_custom_call.1} parent=1 // pred_check
      _
    $region39: #{tpu_custom_call.1} parent=1 // pred_check_branch
      %301 = sbr.rel (0) target = $region41
    $region40: #{tpu_custom_call.1} parent=1 // pred_region
      %302 = dma.done [#allocation4], 128
    $region41: #{tpu_custom_call.1} parent=1 // pred_fallthru
      _
    %303 = vsyncpa [#allocation3], 1
    %304 = vsyncpa [#allocation6], 1
    %305 = vsyncpa [#allocation4], 1

</llo_original>
